<compile_context>
chip_gen: v6e
topology: v6e:2x2x1
jax: 0.10.0
libtpu: 0.0.40
codegen_flags: <defaults>
</compile_context>

<pallas_src>
import jax
import jax.numpy as jnp
import numpy as np
from jax import lax
from jax.experimental import pallas as pl
from jax.experimental.pallas import tpu as pltpu


def _round_up(v, m):
    return ((v + m - 1) // m) * m


# ----------------------------------------------------------------------------
# Pallas kernel
# ----------------------------------------------------------------------------
def _mingru_kernel(x_ref, lt_ref, w_h_ref, w_g_ref, w_of_ref, o_ref):
    """One batch-block (Bb batch elements) per grid step, transposed layout.

    x_ref   : (1, F, Np)   Np = round_up(Bb*S, 128) tokens on the lane axis
    lt_ref  : (Np, Np)     block lower-triangular 0/1 matrix, bf16 (exact)
    w_h_ref : (Dp, F)      fused  W_hg[:D] @ W_in   (hidden path)
    w_g_ref : (Dp, F)      fused  W_hg[D:] @ W_in   (gate path)
    w_of_ref: (1, Dp)      fused  final_proj @ to_out
    o_ref   : (1, 1, Np)   predictions (lane-dense row)
    """
    xT = x_ref[0]                        # (F, Np) f32
    lt_bf = lt_ref[...]                  # (Np, Np) bf16, exact 0/1
    lt_f32 = lt_bf.astype(jnp.float32)

    # fused input_proj + to_hidden_and_gate: (Dp, F) @ (F, Np) -> (Dp, Np)
    hidden = jnp.dot(w_h_ref[...], xT, preferred_element_type=jnp.float32)
    gate = jnp.dot(w_g_ref[...], xT, preferred_element_type=jnp.float32)

    def softplus(v):
        # stable softplus with a single exp + log1p (f32 on all generations)
        return jnp.maximum(v, 0.0) + jnp.log1p(jnp.exp(-jnp.abs(v)))

    sp_gate = softplus(gate)
    log_coeffs = -sp_gate                 # -softplus(gate)
    log_z = gate - sp_gate                # == -softplus(-gate), exactly
    log_tilde_h = jnp.where(
        hidden >= 0.0,
        jnp.log(jnp.maximum(hidden, 0.0) + 0.5),
        -softplus(-hidden),
    )
    log_values = log_z + log_tilde_h      # (Dp, Np)

    # heinsen associative scan in log space; cumulative sums along the
    # sequence (lane) axis via the resident block-triangular matrix on the MXU.
    # a_star stays f32 (it feeds exp() directly); the exp-sum matmul uses bf16
    # operands (values in [0,1] and exact 0/1 matrix) with f32 accumulation.
    a_star = jnp.dot(log_coeffs, lt_f32, preferred_element_type=jnp.float32)
    shifted = log_values - a_star
    # TODO(synk): for long sequences, chunk the scan with a carried running
    # max / sum-exp / a_star prefix instead of a single per-row max shift
    # (avoids underflow of early timesteps and the O(S^2) triangular matrix).
    m = jnp.max(shifted, axis=1, keepdims=True)                 # (Dp, 1)
    cs = jnp.dot(jnp.exp(shifted - m).astype(jnp.bfloat16), lt_bf,
                 preferred_element_type=jnp.float32)            # (Dp, Np)
    log_h = a_star + m + jnp.log(cs)
    out = jnp.exp(log_h)                                        # (Dp, Np)

    # fused (final_proj @ to_out): (1, Dp) @ (Dp, Np) -> (1, Np), lane-dense
    preds = jnp.dot(w_of_ref[...], out, preferred_element_type=jnp.float32)
    o_ref[...] = preds[None]                                    # (1, 1, Np)


# ----------------------------------------------------------------------------
# Wrapper
# ----------------------------------------------------------------------------
@jax.jit
def stock_predictor_gru(x, w_in, w_hg, w_out, w_fin):
    """x: (B, S, F); weights in PyTorch (out, in) layout:
       w_in (H, F), w_hg (2D, H), w_out (H, D), w_fin (1, H).
       Returns predictions of shape (B, S)."""
    f32 = jnp.float32
    B, S, F = x.shape
    H = w_in.shape[0]
    D = w_hg.shape[0] // 2

    # --- batch blocking ------------------------------------------------------
    # Target ~256 tokens per grid step: enough to amortize the ~0.35 us step
    # overhead and keep lanes dense, small enough that the O(N^2) triangular
    # scan matmul (the only Bb^2-growing term) stays in the noise and the
    # (N,N) matrix is tiny in VMEM (fine even on v7x's 32 MiB scoped limit).
    TOKEN_TARGET = 256
    Bb = pl.cdiv(TOKEN_TARGET, S) if S < TOKEN_TARGET else 1
    # Prefer >= 2 grid steps (v7x has 2 TensorCores) while staying lane-dense.
    while Bb > 1 and pl.cdiv(B, Bb) < 2 and (Bb // 2) * S >= 128:
        Bb //= 2
    G = pl.cdiv(B, Bb)          # grid steps
    B_pad = G * Bb              # batch padded with dummy (zero) sequences
    N = Bb * S                  # real tokens per block
    Np = _round_up(N, 128)      # lane-dense token width

    Dp = _round_up(D, 8)        # Dp always sits on the sublane axis -> mult of 8

    # --- fuse / pad weights (zero padding is inert: w_of pad entries are 0) ---
    w_in_f = w_in.astype(f32)
    w_h = w_hg[:D].astype(f32) @ w_in_f                       # (D, F)
    w_g = w_hg[D:].astype(f32) @ w_in_f                       # (D, F)
    w_h_p = jnp.zeros((Dp, F), f32).at[:D].set(w_h)
    w_g_p = jnp.zeros((Dp, F), f32).at[:D].set(w_g)
    w_of = w_fin.astype(f32) @ w_out.astype(f32)              # (1, D)
    w_of_p = jnp.zeros((1, Dp), f32).at[:, :D].set(w_of)

    # --- transposed, batch-blocked, lane-padded input: (G, F, Np) ------------
    x_p = jnp.zeros((B_pad, S, F), f32).at[:B].set(x.astype(f32))
    xT = x_p.reshape(G, N, F).transpose(0, 2, 1)              # (G, F, N)
    if Np > N:
        xT = jnp.pad(xT, ((0, 0), (0, 0), (0, Np - N)))

    # --- block lower-triangular cumsum matrix (resident in VMEM, bf16=exact) --
    idx = jnp.arange(Np)
    lt = ((idx[:, None] <= idx[None, :]) &
          (idx[:, None] // S == idx[None, :] // S)).astype(jnp.bfloat16)

    out = pl.pallas_call(
        _mingru_kernel,
        out_shape=jax.ShapeDtypeStruct((G, 1, Np), f32),
        grid_spec=pltpu.PrefetchScalarGridSpec(
            num_scalar_prefetch=0,
            grid=(G,),
            in_specs=[
                pl.BlockSpec((1, F, Np), lambda g: (g, 0, 0)),
                pl.BlockSpec((Np, Np), lambda g: (0, 0)),
                pl.BlockSpec((Dp, F), lambda g: (0, 0)),
                pl.BlockSpec((Dp, F), lambda g: (0, 0)),
                pl.BlockSpec((1, Dp), lambda g: (0, 0)),
            ],
            out_specs=pl.BlockSpec((1, 1, Np), lambda g: (g, 0, 0)),
        ),
        compiler_params=pltpu.CompilerParams(
            dimension_semantics=("parallel",),
        ),
    )(xT, lt, w_h_p, w_g_p, w_of_p)

    # drop padded token columns and padded batch rows
    return out[:, 0, :N].reshape(B_pad, S)[:B]


# ----------------------------------------------------------------------------
# Pure-JAX reference (mirrors the PyTorch forward, PyTorch weight layout)
# ----------------------------------------------------------------------------
def reference_forward(x, w_in, w_hg, w_out, w_fin):
    h = x @ w_in.T
    hg = h @ w_hg.T
    hidden, gate = jnp.split(hg, 2, axis=-1)
    log_coeffs = -jax.nn.softplus(gate)
    log_z = -jax.nn.softplus(-gate)
    log_tilde_h = jnp.where(
        hidden >= 0.0,
        jnp.log(jax.nn.relu(hidden) + 0.5),
        -jax.nn.softplus(-hidden),
    )
    log_values = log_z + log_tilde_h
    a_star = jnp.cumsum(log_coeffs, axis=1)
    log_h0 = lax.cumlogsumexp(log_values - a_star, axis=1)
    out = jnp.exp(a_star + log_h0)
    out = out @ w_out.T
    preds = (out @ w_fin.T)[..., 0]
    return preds


# ----------------------------------------------------------------------------
# Main
# ----------------------------------------------------------------------------
if __name__ == "__main__":
    B, S = 2, 8
    INPUT_DIM = 4
    HIDDEN_DIM = 32
    EXPANSION = 1.5
    DIM_INNER = int(HIDDEN_DIM * EXPANSION)  # 48

    key = jax.random.PRNGKey(0)
    kx, k1, k2, k3, k4 = jax.random.split(key, 5)

    def init_linear(k, fan_out, fan_in):
        # PyTorch nn.Linear default init, weight stored as (out, in).
        bound = 1.0 / np.sqrt(fan_in)
        return jax.random.uniform(
            k, (fan_out, fan_in), jnp.float32, minval=-bound, maxval=bound
        )

    x = jax.random.normal(kx, (B, S, INPUT_DIM), jnp.float32)
    w_in = init_linear(k1, HIDDEN_DIM, INPUT_DIM)          # input_proj
    w_hg = init_linear(k2, DIM_INNER * 2, HIDDEN_DIM)      # to_hidden_and_gate
    w_out = init_linear(k3, HIDDEN_DIM, DIM_INNER)         # to_out
    w_fin = init_linear(k4, 1, HIDDEN_DIM)                 # final_proj

    preds = jax.block_until_ready(stock_predictor_gru(x, w_in, w_hg, w_out, w_fin))
    ref = jax.block_until_ready(reference_forward(x, w_in, w_hg, w_out, w_fin))
    # Slightly loosened tolerance: the logcumsumexp matmul uses bf16 operands
    # (exp values in [0,1] with exact 0/1 matrix) -> <~0.2% relative deviation.
    np.testing.assert_allclose(np.asarray(preds), np.asarray(ref),
                               rtol=5e-3, atol=5e-3)

    print("KERNEL_OK")
</pallas_src>

<mosaic_0001>
module attributes {stable_mosaic.version = 11 : i64} {
  func.func @_mingru_kernel(%arg0: i32, %arg1: memref<1x4x128xf32, #tpu.memory_space<vmem>>, %arg2: memref<128x128xbf16, #tpu.memory_space<vmem>>, %arg3: memref<48x4xf32, #tpu.memory_space<vmem>>, %arg4: memref<48x4xf32, #tpu.memory_space<vmem>>, %arg5: memref<1x48xf32, #tpu.memory_space<vmem>>, %arg6: memref<1x1x128xf32, #tpu.memory_space<vmem>>) attributes {dimension_semantics = [#tpu.dimension_semantics<parallel>], iteration_bounds = array<i64: 1>, scalar_prefetch = 0 : i64, scratch_operands = 0 : i64, tpu.core_type = #tpu.core_type<tc>, window_params = [{transform_indices = @transform_0, window_bounds = array<i64: 1, 4, 128>}, {pipeline_mode = #tpu.pipeline_mode<synchronous>, transform_indices = @transform_1, window_bounds = array<i64: 128, 128>}, {pipeline_mode = #tpu.pipeline_mode<synchronous>, transform_indices = @transform_2, window_bounds = array<i64: 48, 4>}, {pipeline_mode = #tpu.pipeline_mode<synchronous>, transform_indices = @transform_3, window_bounds = array<i64: 48, 4>}, {pipeline_mode = #tpu.pipeline_mode<synchronous>, transform_indices = @transform_4, window_bounds = array<i64: 1, 48>}, {transform_indices = @transform_5, window_bounds = array<i64: 1, 1, 128>}]} {
    %c0 = arith.constant 0 : index
    %c0_0 = arith.constant 0 : index
    %c0_1 = arith.constant 0 : index
    %0 = vector.load %arg1[%c0, %c0_0, %c0_1] : memref<1x4x128xf32, #tpu.memory_space<vmem>>, vector<1x4x128xf32>
    %1 = vector.shape_cast %0 : vector<1x4x128xf32> to vector<4x128xf32>
    %c0_2 = arith.constant 0 : index
    %c0_3 = arith.constant 0 : index
    %2 = vector.load %arg2[%c0_2, %c0_3] : memref<128x128xbf16, #tpu.memory_space<vmem>>, vector<128x128xbf16>
    %3 = arith.extf %2 : vector<128x128xbf16> to vector<128x128xf32>
    %c0_4 = arith.constant 0 : index
    %c0_5 = arith.constant 0 : index
    %4 = vector.load %arg3[%c0_4, %c0_5] : memref<48x4xf32, #tpu.memory_space<vmem>>, vector<48x4xf32>
    %cst = arith.constant dense<0.000000e+00> : vector<48x128xf32>
    %5 = tpu.matmul %4, %1, %cst {dimension_numbers = #tpu.dot_dimension_numbers<[1], [0], [0], [1], [0, 0, 1, 1], [], []>} : vector<48x4xf32>, vector<4x128xf32>, vector<48x128xf32> -> vector<48x128xf32>
    %c0_6 = arith.constant 0 : index
    %c0_7 = arith.constant 0 : index
    %6 = vector.load %arg4[%c0_6, %c0_7] : memref<48x4xf32, #tpu.memory_space<vmem>>, vector<48x4xf32>
    %cst_8 = arith.constant dense<0.000000e+00> : vector<48x128xf32>
    %7 = tpu.matmul %6, %1, %cst_8 {dimension_numbers = #tpu.dot_dimension_numbers<[1], [0], [0], [1], [0, 0, 1, 1], [], []>} : vector<48x4xf32>, vector<4x128xf32>, vector<48x128xf32> -> vector<48x128xf32>
    %cst_9 = arith.constant 0.000000e+00 : f32
    %8 = vector.broadcast %cst_9 : f32 to vector<48x128xf32>
    %9 = arith.maximumf %7, %8 : vector<48x128xf32>
    %10 = math.absf %7 : vector<48x128xf32>
    %cst_10 = arith.constant 0.000000e+00 : f32
    %11 = vector.broadcast %cst_10 : f32 to vector<48x128xf32>
    %12 = arith.subf %11, %10 : vector<48x128xf32>
    %13 = math.exp %12 : vector<48x128xf32>
    %14 = math.log1p %13 : vector<48x128xf32>
    %15 = arith.addf %9, %14 : vector<48x128xf32>
    %cst_11 = arith.constant 0.000000e+00 : f32
    %16 = vector.broadcast %cst_11 : f32 to vector<48x128xf32>
    %17 = arith.subf %16, %15 : vector<48x128xf32>
    %18 = arith.subf %7, %15 : vector<48x128xf32>
    %cst_12 = arith.constant 0.000000e+00 : f32
    %19 = vector.broadcast %cst_12 : f32 to vector<48x128xf32>
    %20 = arith.cmpf oge, %5, %19 : vector<48x128xf32>
    %cst_13 = arith.constant 0.000000e+00 : f32
    %21 = vector.broadcast %cst_13 : f32 to vector<48x128xf32>
    %22 = arith.maximumf %5, %21 : vector<48x128xf32>
    %cst_14 = arith.constant 5.000000e-01 : f32
    %23 = vector.broadcast %cst_14 : f32 to vector<48x128xf32>
    %24 = arith.addf %22, %23 : vector<48x128xf32>
    %25 = math.log %24 : vector<48x128xf32>
    %cst_15 = arith.constant 0.000000e+00 : f32
    %26 = vector.broadcast %cst_15 : f32 to vector<48x128xf32>
    %27 = arith.subf %26, %5 : vector<48x128xf32>
    %cst_16 = arith.constant 0.000000e+00 : f32
    %28 = vector.broadcast %cst_16 : f32 to vector<48x128xf32>
    %29 = arith.maximumf %27, %28 : vector<48x128xf32>
    %30 = math.absf %27 : vector<48x128xf32>
    %cst_17 = arith.constant 0.000000e+00 : f32
    %31 = vector.broadcast %cst_17 : f32 to vector<48x128xf32>
    %32 = arith.subf %31, %30 : vector<48x128xf32>
    %33 = math.exp %32 : vector<48x128xf32>
    %34 = math.log1p %33 : vector<48x128xf32>
    %35 = arith.addf %29, %34 : vector<48x128xf32>
    %cst_18 = arith.constant 0.000000e+00 : f32
    %36 = vector.broadcast %cst_18 : f32 to vector<48x128xf32>
    %37 = arith.subf %36, %35 : vector<48x128xf32>
    %38 = arith.select %20, %25, %37 : vector<48x128xi1>, vector<48x128xf32>
    %39 = arith.addf %18, %38 : vector<48x128xf32>
    %cst_19 = arith.constant dense<0.000000e+00> : vector<48x128xf32>
    %40 = tpu.matmul %17, %3, %cst_19 {dimension_numbers = #tpu.dot_dimension_numbers<[1], [0], [0], [1], [0, 0, 1, 1], [], []>} : vector<48x128xf32>, vector<128x128xf32>, vector<48x128xf32> -> vector<48x128xf32>
    %41 = arith.subf %39, %40 : vector<48x128xf32>
    %cst_20 = arith.constant dense<0xFF800000> : vector<48xf32>
    %42 = vector.multi_reduction <maximumf>, %41, %cst_20 [1] : vector<48x128xf32> to vector<48xf32>
    %43 = vector.shape_cast %42 : vector<48xf32> to vector<48x1xf32>
    %44 = vector.broadcast %43 : vector<48x1xf32> to vector<48x128xf32>
    %45 = arith.subf %41, %44 : vector<48x128xf32>
    %46 = math.exp %45 : vector<48x128xf32>
    %47 = arith.truncf %46 : vector<48x128xf32> to vector<48x128xbf16>
    %cst_21 = arith.constant dense<0.000000e+00> : vector<48x128xf32>
    %48 = tpu.matmul %47, %2, %cst_21 {dimension_numbers = #tpu.dot_dimension_numbers<[1], [0], [0], [1], [0, 0, 1, 1], [], []>} : vector<48x128xbf16>, vector<128x128xbf16>, vector<48x128xf32> -> vector<48x128xf32>
    %49 = vector.broadcast %43 : vector<48x1xf32> to vector<48x128xf32>
    %50 = arith.addf %40, %49 : vector<48x128xf32>
    %51 = math.log %48 : vector<48x128xf32>
    %52 = arith.addf %50, %51 : vector<48x128xf32>
    %53 = math.exp %52 : vector<48x128xf32>
    %c0_22 = arith.constant 0 : index
    %c0_23 = arith.constant 0 : index
    %54 = vector.load %arg5[%c0_22, %c0_23] : memref<1x48xf32, #tpu.memory_space<vmem>>, vector<1x48xf32>
    %cst_24 = arith.constant dense<0.000000e+00> : vector<1x128xf32>
    %55 = tpu.matmul %54, %53, %cst_24 {dimension_numbers = #tpu.dot_dimension_numbers<[1], [0], [0], [1], [0, 0, 1, 1], [], []>} : vector<1x48xf32>, vector<48x128xf32>, vector<1x128xf32> -> vector<1x128xf32>
    %56 = vector.shape_cast %55 : vector<1x128xf32> to vector<1x1x128xf32>
    %c0_25 = arith.constant 0 : index
    %c0_26 = arith.constant 0 : index
    %c0_27 = arith.constant 0 : index
    %57 = vector.load %arg6[%c0_25, %c0_26, %c0_27] : memref<1x1x128xf32, #tpu.memory_space<vmem>>, vector<1x1x128xf32>
    tpu.vector_store %arg6[%c0_25, %c0_26, %c0_27], %56 {strides = array<i32>} : memref<1x1x128xf32, #tpu.memory_space<vmem>>, vector<1x1x128xf32>,
    return
  }
  func.func @transform_0(%arg0: i32) -> (i32, i32, i32) {
    %c0_i32 = arith.constant 0 : i32
    %c0_i32_0 = arith.constant 0 : i32
    %c0_i32_1 = arith.constant 0 : i32
    return %arg0, %c0_i32, %c0_i32_0 : i32, i32, i32
  }
  func.func @transform_1(%arg0: i32) -> (i32, i32) {
    %c0_i32 = arith.constant 0 : i32
    %c0_i32_0 = arith.constant 0 : i32
    %c0_i32_1 = arith.constant 0 : i32
    return %c0_i32, %c0_i32_0 : i32, i32
  }
  func.func @transform_2(%arg0: i32) -> (i32, i32) {
    %c0_i32 = arith.constant 0 : i32
    %c0_i32_0 = arith.constant 0 : i32
    %c0_i32_1 = arith.constant 0 : i32
    return %c0_i32, %c0_i32_0 : i32, i32
  }
  func.func @transform_3(%arg0: i32) -> (i32, i32) {
    %c0_i32 = arith.constant 0 : i32
    %c0_i32_0 = arith.constant 0 : i32
    %c0_i32_1 = arith.constant 0 : i32
    return %c0_i32, %c0_i32_0 : i32, i32
  }
  func.func @transform_4(%arg0: i32) -> (i32, i32) {
    %c0_i32 = arith.constant 0 : i32
    %c0_i32_0 = arith.constant 0 : i32
    %c0_i32_1 = arith.constant 0 : i32
    return %c0_i32, %c0_i32_0 : i32, i32
  }
  func.func @transform_5(%arg0: i32) -> (i32, i32, i32) {
    %c0_i32 = arith.constant 0 : i32
    %c0_i32_0 = arith.constant 0 : i32
    %c0_i32_1 = arith.constant 0 : i32
    return %arg0, %c0_i32, %c0_i32_0 : i32, i32, i32
  }
}

</mosaic_0001>

<llo_original>
// kernel: stock_predictor_gru.1
$region0: #{stock_predictor_gru.1}
  #allocation0 [shape = 'u32[]', space=smem, size = 0x4, offset = 0x4, fixed_abs, tag = 'smem constant byte address 0x4 - core index']
  #allocation1 [shape = 'u32[144,128]{1,0:T(1,128)}', space=vmem, size = 0x12000, scoped, tag = 'internal scratch']
  %s0 = inlined_call_operand.vmem [shape: f32[1,4,128], index: 0, kind: input, shape index: {}]
  %s1 = inlined_call_operand.vmem [shape: bf16[128,128], index: 1, kind: input, shape index: {}]
  %s2 = inlined_call_operand.vmem [shape: f32[48,4], index: 2, kind: input, shape index: {}]
  %s3 = inlined_call_operand.vmem [shape: f32[48,4], index: 3, kind: input, shape index: {}]
  %s4 = inlined_call_operand.vmem [shape: f32[1,48], index: 4, kind: input, shape index: {}]
  %s5 = inlined_call_operand.vmem [shape: f32[1,1,128], index: 5, kind: output, shape index: {}]
  %s6 = sld [smem:[#allocation0]]
  $region30: #{stock_predictor_gru.1} parent=0
    _
  %s8 = ssub.s32 1, %s6
  %s9 = scalar_select 0, %s8, %s6
  // Predicated region
  $region2: #{stock_predictor_gru.1} parent=0 // pred_check
    _
  $region3: #{stock_predictor_gru.1} parent=0 // pred_check_branch
    %11 = sbr.rel (0) target = $region5
  $region4: #{stock_predictor_gru.1} parent=0 // pred_region
    _
  $region5: #{stock_predictor_gru.1} parent=0 // pred_fallthru
    _
  // Predicated region
  $region6: #{stock_predictor_gru.1} parent=0 // pred_check
    _
  $region7: #{stock_predictor_gru.1} parent=0 // pred_check_branch
    %13 = sbr.rel (0) target = $region9
  $region8: #{stock_predictor_gru.1} parent=0 // pred_region
    _
  $region9: #{stock_predictor_gru.1} parent=0 // pred_fallthru
    _
  // Predicated region
  $region10: #{stock_predictor_gru.1} parent=0 // pred_check
    _
  $region11: #{stock_predictor_gru.1} parent=0 // pred_check_branch
    %15 = sbr.rel (0) target = $region13
  $region12: #{stock_predictor_gru.1} parent=0 // pred_region
    _
  $region13: #{stock_predictor_gru.1} parent=0 // pred_fallthru
    _
  // Predicated region
  $region14: #{stock_predictor_gru.1} parent=0 // pred_check
    _
  $region15: #{stock_predictor_gru.1} parent=0 // pred_check_branch
    %17 = sbr.rel (0) target = $region17
  $region16: #{stock_predictor_gru.1} parent=0 // pred_region
    _
  $region17: #{stock_predictor_gru.1} parent=0 // pred_fallthru
    _
  // Predicated region
  $region18: #{stock_predictor_gru.1} parent=0 // pred_check
    _
  $region19: #{stock_predictor_gru.1} parent=0 // pred_check_branch
    %19 = sbr.rel (0) target = $region21
  $region20: #{stock_predictor_gru.1} parent=0 // pred_region
    _
  $region21: #{stock_predictor_gru.1} parent=0 // pred_fallthru
    _
  %v21 = vld [vmem:[%s0] sm:$0xf]
  %v22 = vld [vmem:[%s1] sm:$0xf]
  %v23 = vld [vmem:[%s1 + $0x4] sm:$0xf]
  %v24 = vld [vmem:[%s1 + $0x8] sm:$0xf]
  %v25 = vld [vmem:[%s1 + $0xc] sm:$0xf]
  %v26 = vld [vmem:[%s1 + $0x10] sm:$0xf]
  %v27 = vld [vmem:[%s1 + $0x14] sm:$0xf]
  %v28 = vld [vmem:[%s1 + $0x18] sm:$0xf]
  %v29 = vld [vmem:[%s1 + $0x1c] sm:$0xf]
  %v30 = vld [vmem:[%s1 + $0x20] sm:$0xf]
  %v31 = vld [vmem:[%s1 + $0x24] sm:$0xf]
  %v32 = vld [vmem:[%s1 + $0x28] sm:$0xf]
  %v33 = vld [vmem:[%s1 + $0x2c] sm:$0xf]
  %v34 = vld [vmem:[%s1 + $0x30] sm:$0xf]
  %v35 = vld [vmem:[%s1 + $0x34] sm:$0xf]
  %v36 = vld [vmem:[%s1 + $0x38] sm:$0xf]
  %v37 = vld [vmem:[%s1 + $0x3c] sm:$0xf]
  %v38 = vunpack.c.l.bf16 %v22
  %v39 = vunpack.c.l.bf16 %v23
  %v40 = vunpack.c.l.bf16 %v24
  %v41 = vunpack.c.l.bf16 %v25
  %v42 = vunpack.c.l.bf16 %v26
  %v43 = vunpack.c.l.bf16 %v27
  %v44 = vunpack.c.l.bf16 %v28
  %v45 = vunpack.c.l.bf16 %v29
  %v46 = vunpack.c.l.bf16 %v30
  %v47 = vunpack.c.l.bf16 %v31
  %v48 = vunpack.c.l.bf16 %v32
  %v49 = vunpack.c.l.bf16 %v33
  %v50 = vunpack.c.l.bf16 %v34
  %v51 = vunpack.c.l.bf16 %v35
  %v52 = vunpack.c.l.bf16 %v36
  %v53 = vunpack.c.l.bf16 %v37
  %v54 = vld [vmem:[%s2] sm:$0xff]
  %v55 = vld [vmem:[%s2 + $0x8] sm:$0xff]
  %v56 = vld [vmem:[%s2 + $0x10] sm:$0xff]
  %v57 = vld [vmem:[%s2 + $0x18] sm:$0xff]
  %v58 = vld [vmem:[%s2 + $0x20] sm:$0xff]
  %v59 = vld [vmem:[%s2 + $0x28] sm:$0xff]
  %vm60 = vcmask 31744
  %v62 = vsel %vm60, %v54, 0
  %v65 = vsel %vm60, %v55, 0
  %v68 = vsel %vm60, %v56, 0
  %v71 = vsel %vm60, %v57, 0
  %v74 = vsel %vm60, %v58, 0
  %v77 = vsel %vm60, %v59, 0
  %vm79 = vcmask 1043456
  %v81 = vsel %vm79, %v21, 0
  %83 = vmatprep.subr.mxu0 0.0
  %84 = vmatpush1.msra.mxu0 0.0
  %85 = vmatprep.subr.mxu0 0.0
  %86 = vmatpush1.msra.mxu0 0.0
  %87 = vmatprep.subr.mxu0 0.0
  %88 = vmatpush1.msra.mxu0 0.0
  %89 = vmatprep.subr.mxu0 0.0
  %90 = vmatpush1.msra.mxu0 0.0
  %91 = vmatprep.subr.mxu0 0.0
  %92 = vmatpush1.msra.mxu0 0.0
  %93 = vmatprep.subr.mxu0 0.0
  %94 = vmatpush1.msra.mxu0 0.0
  %95 = vmatprep.subr.mxu0 0.0
  %96 = vmatpush1.msra.mxu0 0.0
  %97 = vmatprep.subr.mxu0 0.0
  %98 = vmatpush1.msra.mxu0 0.0
  %99 = vmatprep.subr.mxu0 0.0
  %100 = vmatpush1.msra.mxu0 0.0
  %101 = vmatprep.subr.mxu0 0.0
  %102 = vmatpush1.msra.mxu0 0.0
  %103 = vmatprep.subr.mxu0 0.0
  %104 = vmatpush1.msra.mxu0 0.0
  %105 = vmatprep.subr.mxu0 0.0
  %106 = vmatpush1.msra.mxu0 0.0
  %107 = vmatprep.subr.mxu0 0.0
  %108 = vmatpush1.msra.mxu0 0.0
  %109 = vmatprep.subr.mxu0 0.0
  %110 = vmatpush1.msra.mxu0 0.0
  %111 = vmatprep.subr.mxu0 0.0
  %112 = vmatpush1.msra.mxu0 0.0
  %113 = vmatprep.subr.mxu0 0.0
  %114 = vmatpush1.msra.mxu0 %v81
  %115 = vmatprep.subr.mxu0 0.0
  %116 = vmatpush2.msra.mxu0 0.0
  %117 = vmatprep.subr.mxu0 0.0
  %118 = vmatpush2.msra.mxu0 0.0
  %119 = vmatprep.subr.mxu0 0.0
  %120 = vmatpush2.msra.mxu0 0.0
  %121 = vmatprep.subr.mxu0 0.0
  %122 = vmatpush2.msra.mxu0 0.0
  %123 = vmatprep.subr.mxu0 0.0
  %124 = vmatpush2.msra.mxu0 0.0
  %125 = vmatprep.subr.mxu0 0.0
  %126 = vmatpush2.msra.mxu0 0.0
  %127 = vmatprep.subr.mxu0 0.0
  %128 = vmatpush2.msra.mxu0 0.0
  %129 = vmatprep.subr.mxu0 0.0
  %130 = vmatpush2.msra.mxu0 0.0
  %131 = vmatprep.subr.mxu0 0.0
  %132 = vmatpush2.msra.mxu0 0.0
  %133 = vmatprep.subr.mxu0 0.0
  %134 = vmatpush2.msra.mxu0 0.0
  %135 = vmatprep.subr.mxu0 0.0
  %136 = vmatpush2.msra.mxu0 0.0
  %137 = vmatprep.subr.mxu0 0.0
  %138 = vmatpush2.msra.mxu0 0.0
  %139 = vmatprep.subr.mxu0 0.0
  %140 = vmatpush2.msra.mxu0 0.0
  %141 = vmatprep.subr.mxu0 0.0
  %142 = vmatpush2.msra.mxu0 0.0
  %143 = vmatprep.subr.mxu0 0.0
  %144 = vmatpush2.msra.mxu0 0.0
  %145 = vmatprep.subr.mxu0 0.0
  %146 = vmatpush2.msra.mxu0 0.0
  %147 = vmatprep.mubr.f32.mxu0 0.0
  %148 = vmatmul.mubr.f32.gmra.mxu0 %v62
  %v149 = vpop.f32.mrf.mxu0
  %v150 = vadd.f32 0.0, %v149
  %v151 = vpop.f32.mrf.mxu0
  %152 = vmatprep.mubr.f32.mxu0 0.0
  %153 = vmatmul.mubr.f32.gmra.mxu0 %v65
  %v154 = vpop.f32.mrf.mxu0
  %v155 = vadd.f32 0.0, %v154
  %v156 = vpop.f32.mrf.mxu0
  %157 = vmatprep.mubr.f32.mxu0 0.0
  %158 = vmatmul.mubr.f32.gmra.mxu0 %v68
  %v159 = vpop.f32.mrf.mxu0
  %v160 = vadd.f32 0.0, %v159
  %v161 = vpop.f32.mrf.mxu0
  %162 = vmatprep.mubr.f32.mxu0 0.0
  %163 = vmatmul.mubr.f32.gmra.mxu0 %v71
  %v164 = vpop.f32.mrf.mxu0
  %v165 = vadd.f32 0.0, %v164
  %v166 = vpop.f32.mrf.mxu0
  %167 = vmatprep.mubr.f32.mxu0 0.0
  %168 = vmatmul.mubr.f32.gmra.mxu0 %v74
  %v169 = vpop.f32.mrf.mxu0
  %v170 = vadd.f32 0.0, %v169
  %v171 = vpop.f32.mrf.mxu0
  %172 = vmatprep.mubr.f32.mxu0 0.0
  %173 = vmatmul.mubr.f32.gmra.mxu0 %v77
  %v174 = vpop.f32.mrf.mxu0
  %v175 = vadd.f32 0.0, %v174
  %v176 = vpop.f32.mrf.mxu0
  %177 = vdwg.mxu0
  %v178 = vld [vmem:[%s3] sm:$0xff]
  %v179 = vld [vmem:[%s3 + $0x8] sm:$0xff]
  %v180 = vld [vmem:[%s3 + $0x10] sm:$0xff]
  %v181 = vld [vmem:[%s3 + $0x18] sm:$0xff]
  %v182 = vld [vmem:[%s3 + $0x20] sm:$0xff]
  %v183 = vld [vmem:[%s3 + $0x28] sm:$0xff]
  %v185 = vsel %vm60, %v178, 0
  %v188 = vsel %vm60, %v179, 0
  %v191 = vsel %vm60, %v180, 0
  %v194 = vsel %vm60, %v181, 0
  %v197 = vsel %vm60, %v182, 0
  %v200 = vsel %vm60, %v183, 0
  %202 = vmatprep.subr.mxu0 0.0
  %203 = vmatpush1.msra.mxu0 0.0
  %204 = vmatprep.subr.mxu0 0.0
  %205 = vmatpush1.msra.mxu0 0.0
  %206 = vmatprep.subr.mxu0 0.0
  %207 = vmatpush1.msra.mxu0 0.0
  %208 = vmatprep.subr.mxu0 0.0
  %209 = vmatpush1.msra.mxu0 0.0
  %210 = vmatprep.subr.mxu0 0.0
  %211 = vmatpush1.msra.mxu0 0.0
  %212 = vmatprep.subr.mxu0 0.0
  %213 = vmatpush1.msra.mxu0 0.0
  %214 = vmatprep.subr.mxu0 0.0
  %215 = vmatpush1.msra.mxu0 0.0
  %216 = vmatprep.subr.mxu0 0.0
  %217 = vmatpush1.msra.mxu0 0.0
  %218 = vmatprep.subr.mxu0 0.0
  %219 = vmatpush1.msra.mxu0 0.0
  %220 = vmatprep.subr.mxu0 0.0
  %221 = vmatpush1.msra.mxu0 0.0
  %222 = vmatprep.subr.mxu0 0.0
  %223 = vmatpush1.msra.mxu0 0.0
  %224 = vmatprep.subr.mxu0 0.0
  %225 = vmatpush1.msra.mxu0 0.0
  %226 = vmatprep.subr.mxu0 0.0
  %227 = vmatpush1.msra.mxu0 0.0
  %228 = vmatprep.subr.mxu0 0.0
  %229 = vmatpush1.msra.mxu0 0.0
  %230 = vmatprep.subr.mxu0 0.0
  %231 = vmatpush1.msra.mxu0 0.0
  %232 = vmatprep.subr.mxu0 0.0
  %233 = vmatpush1.msra.mxu0 %v81
  %234 = vmatprep.subr.mxu0 0.0
  %235 = vmatpush2.msra.mxu0 0.0
  %236 = vmatprep.subr.mxu0 0.0
  %237 = vmatpush2.msra.mxu0 0.0
  %238 = vmatprep.subr.mxu0 0.0
  %239 = vmatpush2.msra.mxu0 0.0
  %240 = vmatprep.subr.mxu0 0.0
  %241 = vmatpush2.msra.mxu0 0.0
  %242 = vmatprep.subr.mxu0 0.0
  %243 = vmatpush2.msra.mxu0 0.0
  %244 = vmatprep.subr.mxu0 0.0
  %245 = vmatpush2.msra.mxu0 0.0
  %246 = vmatprep.subr.mxu0 0.0
  %247 = vmatpush2.msra.mxu0 0.0
  %248 = vmatprep.subr.mxu0 0.0
  %249 = vmatpush2.msra.mxu0 0.0
  %250 = vmatprep.subr.mxu0 0.0
  %251 = vmatpush2.msra.mxu0 0.0
  %252 = vmatprep.subr.mxu0 0.0
  %253 = vmatpush2.msra.mxu0 0.0
  %254 = vmatprep.subr.mxu0 0.0
  %255 = vmatpush2.msra.mxu0 0.0
  %256 = vmatprep.subr.mxu0 0.0
  %257 = vmatpush2.msra.mxu0 0.0
  %258 = vmatprep.subr.mxu0 0.0
  %259 = vmatpush2.msra.mxu0 0.0
  %260 = vmatprep.subr.mxu0 0.0
  %261 = vmatpush2.msra.mxu0 0.0
  %262 = vmatprep.subr.mxu0 0.0
  %263 = vmatpush2.msra.mxu0 0.0
  %264 = vmatprep.subr.mxu0 0.0
  %265 = vmatpush2.msra.mxu0 0.0
  %266 = vmatprep.mubr.f32.mxu0 0.0
  %267 = vmatmul.mubr.f32.gmra.mxu0 %v185
  %v268 = vpop.f32.mrf.mxu0
  %v269 = vadd.f32 0.0, %v268
  %v270 = vpop.f32.mrf.mxu0
  %271 = vmatprep.mubr.f32.mxu0 0.0
  %272 = vmatmul.mubr.f32.gmra.mxu0 %v188
  %v273 = vpop.f32.mrf.mxu0
  %v274 = vadd.f32 0.0, %v273
  %v275 = vpop.f32.mrf.mxu0
  %276 = vmatprep.mubr.f32.mxu0 0.0
  %277 = vmatmul.mubr.f32.gmra.mxu0 %v191
  %v278 = vpop.f32.mrf.mxu0
  %v279 = vadd.f32 0.0, %v278
  %v280 = vpop.f32.mrf.mxu0
  %281 = vmatprep.mubr.f32.mxu0 0.0
  %282 = vmatmul.mubr.f32.gmra.mxu0 %v194
  %v283 = vpop.f32.mrf.mxu0
  %v284 = vadd.f32 0.0, %v283
  %v285 = vpop.f32.mrf.mxu0
  %286 = vmatprep.mubr.f32.mxu0 0.0
  %287 = vmatmul.mubr.f32.gmra.mxu0 %v197
  %v288 = vpop.f32.mrf.mxu0
  %v289 = vadd.f32 0.0, %v288
  %v290 = vpop.f32.mrf.mxu0
  %291 = vmatprep.mubr.f32.mxu0 0.0
  %292 = vmatmul.mubr.f32.gmra.mxu0 %v200
  %v293 = vpop.f32.mrf.mxu0
  %v294 = vadd.f32 0.0, %v293
  %v295 = vpop.f32.mrf.mxu0
  %296 = vdwg.mxu0
  %v297 = vmax.f32 %v269, 0.0
  %v298 = vmax.f32 %v274, 0.0
  %v299 = vmax.f32 %v279, 0.0
  %v300 = vmax.f32 %v284, 0.0
  %v301 = vmax.f32 %v289, 0.0
  %v302 = vmax.f32 %v294, 0.0
  %v303 = vand.u32 2147483647, %v269
  %v304 = vand.u32 2147483647, %v274
  %v305 = vand.u32 2147483647, %v279
  %v306 = vand.u32 2147483647, %v284
  %v307 = vand.u32 2147483647, %v289
  %v308 = vand.u32 2147483647, %v294
  %v309 = vsub.f32 0.0, %v303
  %v310 = vsub.f32 0.0, %v304
  %v311 = vsub.f32 0.0, %v305
  %v312 = vsub.f32 0.0, %v306
  %v313 = vsub.f32 0.0, %v307
  %v314 = vsub.f32 0.0, %v308
  %v315 = vmul.f32 %v309, 1.442695
  %v316 = vpow.pop %v315
  %v317 = vmul.f32 %v310, 1.442695
  %v318 = vpow.pop %v317
  %v319 = vmul.f32 %v311, 1.442695
  %v320 = vpow.pop %v319
  %v321 = vmul.f32 %v312, 1.442695
  %v322 = vpow.pop %v321
  %v323 = vmul.f32 %v313, 1.442695
  %v324 = vpow.pop %v323
  %v325 = vmul.f32 %v314, 1.442695
  %v326 = vpow.pop %v325
  %v327 = vadd.f32 %v316, 1.0
  %v328 = vlog2.pop %v327
  %v329 = vmul.f32 %v328, 0.6931472
  %v330 = vmul.f32 -0.5, %v316
  %v331 = vadd.f32 %v330, 1.0
  %v332 = vmul.f32 %v331, %v316
  %v333 = vand.u32 2147483647, %v316
  %vm334 = vcmp.lt.f32.partialorder %v333, 0.0004427343
  %v335 = vsel %vm334, %v332, %v329
  %v336 = vadd.f32 %v318, 1.0
  %v337 = vlog2.pop %v336
  %v338 = vmul.f32 %v337, 0.6931472
  %v339 = vmul.f32 -0.5, %v318
  %v340 = vadd.f32 %v339, 1.0
  %v341 = vmul.f32 %v340, %v318
  %v342 = vand.u32 2147483647, %v318
  %vm343 = vcmp.lt.f32.partialorder %v342, 0.0004427343
  %v344 = vsel %vm343, %v341, %v338
  %v345 = vadd.f32 %v320, 1.0
  %v346 = vlog2.pop %v345
  %v347 = vmul.f32 %v346, 0.6931472
  %v348 = vmul.f32 -0.5, %v320
  %v349 = vadd.f32 %v348, 1.0
  %v350 = vmul.f32 %v349, %v320
  %v351 = vand.u32 2147483647, %v320
  %vm352 = vcmp.lt.f32.partialorder %v351, 0.0004427343
  %v353 = vsel %vm352, %v350, %v347
  %v354 = vadd.f32 %v322, 1.0
  %v355 = vlog2.pop %v354
  %v356 = vmul.f32 %v355, 0.6931472
  %v357 = vmul.f32 -0.5, %v322
  %v358 = vadd.f32 %v357, 1.0
  %v359 = vmul.f32 %v358, %v322
  %v360 = vand.u32 2147483647, %v322
  %vm361 = vcmp.lt.f32.partialorder %v360, 0.0004427343
  %v362 = vsel %vm361, %v359, %v356
  %v363 = vadd.f32 %v324, 1.0
  %v364 = vlog2.pop %v363
  %v365 = vmul.f32 %v364, 0.6931472
  %v366 = vmul.f32 -0.5, %v324
  %v367 = vadd.f32 %v366, 1.0
  %v368 = vmul.f32 %v367, %v324
  %v369 = vand.u32 2147483647, %v324
  %vm370 = vcmp.lt.f32.partialorder %v369, 0.0004427343
  %v371 = vsel %vm370, %v368, %v365
  %v372 = vadd.f32 %v326, 1.0
  %v373 = vlog2.pop %v372
  %v374 = vmul.f32 %v373, 0.6931472
  %v375 = vmul.f32 -0.5, %v326
  %v376 = vadd.f32 %v375, 1.0
  %v377 = vmul.f32 %v376, %v326
  %v378 = vand.u32 2147483647, %v326
  %vm379 = vcmp.lt.f32.partialorder %v378, 0.0004427343
  %v380 = vsel %vm379, %v377, %v374
  %v381 = vadd.f32 %v297, %v335
  %v382 = vadd.f32 %v298, %v344
  %v383 = vadd.f32 %v299, %v353
  %v384 = vadd.f32 %v300, %v362
  %v385 = vadd.f32 %v301, %v371
  %v386 = vadd.f32 %v302, %v380
  %v387 = vsub.f32 0.0, %v381
  %v388 = vsub.f32 0.0, %v382
  %v389 = vsub.f32 0.0, %v383
  %v390 = vsub.f32 0.0, %v384
  %v391 = vsub.f32 0.0, %v385
  %v392 = vsub.f32 0.0, %v386
  %v393 = vsub.f32 %v269, %v381
  %v394 = vsub.f32 %v274, %v382
  %v395 = vsub.f32 %v279, %v383
  %v396 = vsub.f32 %v284, %v384
  %v397 = vsub.f32 %v289, %v385
  %v398 = vsub.f32 %v294, %v386
  %vm399 = vcmp.ge.f32.partialorder %v150, 0.0
  %vm400 = vcmp.ge.f32.partialorder %v155, 0.0
  %vm401 = vcmp.ge.f32.partialorder %v160, 0.0
  %vm402 = vcmp.ge.f32.partialorder %v165, 0.0
  %vm403 = vcmp.ge.f32.partialorder %v170, 0.0
  %vm404 = vcmp.ge.f32.partialorder %v175, 0.0
  %v405 = vmax.f32 %v150, 0.0
  %v406 = vmax.f32 %v155, 0.0
  %v407 = vmax.f32 %v160, 0.0
  %v408 = vmax.f32 %v165, 0.0
  %v409 = vmax.f32 %v170, 0.0
  %v410 = vmax.f32 %v175, 0.0
  %v411 = vadd.f32 %v405, 0.5
  %v412 = vadd.f32 %v406, 0.5
  %v413 = vadd.f32 %v407, 0.5
  %v414 = vadd.f32 %v408, 0.5
  %v415 = vadd.f32 %v409, 0.5
  %v416 = vadd.f32 %v410, 0.5
  %v417 = vlog2.pop %v411
  %v418 = vmul.f32 %v417, 0.6931472
  %v419 = vlog2.pop %v412
  %v420 = vmul.f32 %v419, 0.6931472
  %v421 = vlog2.pop %v413
  %v422 = vmul.f32 %v421, 0.6931472
  %v423 = vlog2.pop %v414
  %v424 = vmul.f32 %v423, 0.6931472
  %v425 = vlog2.pop %v415
  %v426 = vmul.f32 %v425, 0.6931472
  %v427 = vlog2.pop %v416
  %v428 = vmul.f32 %v427, 0.6931472
  %v429 = vsub.f32 0.0, %v150
  %v430 = vsub.f32 0.0, %v155
  %v431 = vsub.f32 0.0, %v160
  %v432 = vsub.f32 0.0, %v165
  %v433 = vsub.f32 0.0, %v170
  %v434 = vsub.f32 0.0, %v175
  %v435 = vmax.f32 %v429, 0.0
  %v436 = vmax.f32 %v430, 0.0
  %v437 = vmax.f32 %v431, 0.0
  %v438 = vmax.f32 %v432, 0.0
  %v439 = vmax.f32 %v433, 0.0
  %v440 = vmax.f32 %v434, 0.0
  %v441 = vand.u32 2147483647, %v429
  %v442 = vand.u32 2147483647, %v430
  %v443 = vand.u32 2147483647, %v431
  %v444 = vand.u32 2147483647, %v432
  %v445 = vand.u32 2147483647, %v433
  %v446 = vand.u32 2147483647, %v434
  %v447 = vsub.f32 0.0, %v441
  %v448 = vsub.f32 0.0, %v442
  %v449 = vsub.f32 0.0, %v443
  %v450 = vsub.f32 0.0, %v444
  %v451 = vsub.f32 0.0, %v445
  %v452 = vsub.f32 0.0, %v446
  %v453 = vmul.f32 %v447, 1.442695
  %v454 = vpow.pop %v453
  %v455 = vmul.f32 %v448, 1.442695
  %v456 = vpow.pop %v455
  %v457 = vmul.f32 %v449, 1.442695
  %v458 = vpow.pop %v457
  %v459 = vmul.f32 %v450, 1.442695
  %v460 = vpow.pop %v459
  %v461 = vmul.f32 %v451, 1.442695
  %v462 = vpow.pop %v461
  %v463 = vmul.f32 %v452, 1.442695
  %v464 = vpow.pop %v463
  %v465 = vadd.f32 %v454, 1.0
  %v466 = vlog2.pop %v465
  %v467 = vmul.f32 %v466, 0.6931472
  %v468 = vmul.f32 -0.5, %v454
  %v469 = vadd.f32 %v468, 1.0
  %v470 = vmul.f32 %v469, %v454
  %v471 = vand.u32 2147483647, %v454
  %vm472 = vcmp.lt.f32.partialorder %v471, 0.0004427343
  %v473 = vsel %vm472, %v470, %v467
  %v474 = vadd.f32 %v456, 1.0
  %v475 = vlog2.pop %v474
  %v476 = vmul.f32 %v475, 0.6931472
  %v477 = vmul.f32 -0.5, %v456
  %v478 = vadd.f32 %v477, 1.0
  %v479 = vmul.f32 %v478, %v456
  %v480 = vand.u32 2147483647, %v456
  %vm481 = vcmp.lt.f32.partialorder %v480, 0.0004427343
  %v482 = vsel %vm481, %v479, %v476
  %v483 = vadd.f32 %v458, 1.0
  %v484 = vlog2.pop %v483
  %v485 = vmul.f32 %v484, 0.6931472
  %v486 = vmul.f32 -0.5, %v458
  %v487 = vadd.f32 %v486, 1.0
  %v488 = vmul.f32 %v487, %v458
  %v489 = vand.u32 2147483647, %v458
  %vm490 = vcmp.lt.f32.partialorder %v489, 0.0004427343
  %v491 = vsel %vm490, %v488, %v485
  %v492 = vadd.f32 %v460, 1.0
  %v493 = vlog2.pop %v492
  %v494 = vmul.f32 %v493, 0.6931472
  %v495 = vmul.f32 -0.5, %v460
  %v496 = vadd.f32 %v495, 1.0
  %v497 = vmul.f32 %v496, %v460
  %v498 = vand.u32 2147483647, %v460
  %vm499 = vcmp.lt.f32.partialorder %v498, 0.0004427343
  %v500 = vsel %vm499, %v497, %v494
  %v501 = vadd.f32 %v462, 1.0
  %v502 = vlog2.pop %v501
  %v503 = vmul.f32 %v502, 0.6931472
  %v504 = vmul.f32 -0.5, %v462
  %v505 = vadd.f32 %v504, 1.0
  %v506 = vmul.f32 %v505, %v462
  %v507 = vand.u32 2147483647, %v462
  %vm508 = vcmp.lt.f32.partialorder %v507, 0.0004427343
  %v509 = vsel %vm508, %v506, %v503
  %v510 = vadd.f32 %v464, 1.0
  %v511 = vlog2.pop %v510
  %v512 = vmul.f32 %v511, 0.6931472
  %v513 = vmul.f32 -0.5, %v464
  %v514 = vadd.f32 %v513, 1.0
  %v515 = vmul.f32 %v514, %v464
  %v516 = vand.u32 2147483647, %v464
  %vm517 = vcmp.lt.f32.partialorder %v516, 0.0004427343
  %v518 = vsel %vm517, %v515, %v512
  %v519 = vadd.f32 %v435, %v473
  %v520 = vadd.f32 %v436, %v482
  %v521 = vadd.f32 %v437, %v491
  %v522 = vadd.f32 %v438, %v500
  %v523 = vadd.f32 %v439, %v509
  %v524 = vadd.f32 %v440, %v518
  %v525 = vsub.f32 0.0, %v519
  %v526 = vsub.f32 0.0, %v520
  %v527 = vsub.f32 0.0, %v521
  %v528 = vsub.f32 0.0, %v522
  %v529 = vsub.f32 0.0, %v523
  %v530 = vsub.f32 0.0, %v524
  %v531 = vsel %vm399, %v418, %v525
  %v532 = vsel %vm400, %v420, %v526
  %v533 = vsel %vm401, %v422, %v527
  %v534 = vsel %vm402, %v424, %v528
  %v535 = vsel %vm403, %v426, %v529
  %v536 = vsel %vm404, %v428, %v530
  %v537 = vadd.f32 %v393, %v531
  %v538 = vadd.f32 %v394, %v532
  %v539 = vadd.f32 %v395, %v533
  %v540 = vadd.f32 %v396, %v534
  %v541 = vadd.f32 %v397, %v535
  %v542 = vadd.f32 %v398, %v536
  %543 = vmatprep.subr.mxu0 0.0
  %544 = vmatpush1.msra.mxu0 %v53
  %545 = vmatprep.subr.mxu0 0.0
  %546 = vmatpush1.msra.mxu0 %v52
  %547 = vmatprep.subr.mxu0 0.0
  %548 = vmatpush1.msra.mxu0 %v51
  %549 = vmatprep.subr.mxu0 0.0
  %550 = vmatpush1.msra.mxu0 %v50
  %551 = vmatprep.subr.mxu0 0.0
  %552 = vmatpush1.msra.mxu0 %v49
  %553 = vmatprep.subr.mxu0 0.0
  %554 = vmatpush1.msra.mxu0 %v48
  %555 = vmatprep.subr.mxu0 0.0
  %556 = vmatpush1.msra.mxu0 %v47
  %557 = vmatprep.subr.mxu0 0.0
  %558 = vmatpush1.msra.mxu0 %v46
  %559 = vmatprep.subr.mxu0 0.0
  %560 = vmatpush1.msra.mxu0 %v45
  %561 = vmatprep.subr.mxu0 0.0
  %562 = vmatpush1.msra.mxu0 %v44
  %563 = vmatprep.subr.mxu0 0.0
  %564 = vmatpush1.msra.mxu0 %v43
  %565 = vmatprep.subr.mxu0 0.0
  %566 = vmatpush1.msra.mxu0 %v42
  %567 = vmatprep.subr.mxu0 0.0
  %568 = vmatpush1.msra.mxu0 %v41
  %569 = vmatprep.subr.mxu0 0.0
  %570 = vmatpush1.msra.mxu0 %v40
  %571 = vmatprep.subr.mxu0 0.0
  %572 = vmatpush1.msra.mxu0 %v39
  %573 = vmatprep.subr.mxu0 0.0
  %574 = vmatpush1.msra.mxu0 %v38
  %575 = vmatprep.subr.mxu0 0.0
  %576 = vmatpush2.msra.mxu0 0.0
  %577 = vmatprep.subr.mxu0 0.0
  %578 = vmatpush2.msra.mxu0 0.0
  %579 = vmatprep.subr.mxu0 0.0
  %580 = vmatpush2.msra.mxu0 0.0
  %581 = vmatprep.subr.mxu0 0.0
  %582 = vmatpush2.msra.mxu0 0.0
  %583 = vmatprep.subr.mxu0 0.0
  %584 = vmatpush2.msra.mxu0 0.0
  %585 = vmatprep.subr.mxu0 0.0
  %586 = vmatpush2.msra.mxu0 0.0
  %587 = vmatprep.subr.mxu0 0.0
  %588 = vmatpush2.msra.mxu0 0.0
  %589 = vmatprep.subr.mxu0 0.0
  %590 = vmatpush2.msra.mxu0 0.0
  %591 = vmatprep.subr.mxu0 0.0
  %592 = vmatpush2.msra.mxu0 0.0
  %593 = vmatprep.subr.mxu0 0.0
  %594 = vmatpush2.msra.mxu0 0.0
  %595 = vmatprep.subr.mxu0 0.0
  %596 = vmatpush2.msra.mxu0 0.0
  %597 = vmatprep.subr.mxu0 0.0
  %598 = vmatpush2.msra.mxu0 0.0
  %599 = vmatprep.subr.mxu0 0.0
  %600 = vmatpush2.msra.mxu0 0.0
  %601 = vmatprep.subr.mxu0 0.0
  %602 = vmatpush2.msra.mxu0 0.0
  %603 = vmatprep.subr.mxu0 0.0
  %604 = vmatpush2.msra.mxu0 0.0
  %605 = vmatprep.subr.mxu0 0.0
  %606 = vmatpush2.msra.mxu0 0.0
  %607 = vmatprep.mubr.f32.mxu0 0.0
  %608 = vmatmul.mubr.f32.gmra.mxu0 %v387
  %v609 = vpop.f32.mrf.mxu0
  %v610 = vadd.f32 0.0, %v609
  %v611 = vpop.f32.mrf.mxu0
  %612 = vmatprep.mubr.f32.mxu0 0.0
  %613 = vmatmul.mubr.f32.gmra.mxu0 %v388
  %v614 = vpop.f32.mrf.mxu0
  %v615 = vadd.f32 0.0, %v614
  %v616 = vpop.f32.mrf.mxu0
  %617 = vmatprep.mubr.f32.mxu0 0.0
  %618 = vmatmul.mubr.f32.gmra.mxu0 %v389
  %v619 = vpop.f32.mrf.mxu0
  %v620 = vadd.f32 0.0, %v619
  %v621 = vpop.f32.mrf.mxu0
  %622 = vmatprep.mubr.f32.mxu0 0.0
  %623 = vmatmul.mubr.f32.gmra.mxu0 %v390
  %v624 = vpop.f32.mrf.mxu0
  %v625 = vadd.f32 0.0, %v624
  %v626 = vpop.f32.mrf.mxu0
  %627 = vmatprep.mubr.f32.mxu0 0.0
  %628 = vmatmul.mubr.f32.gmra.mxu0 %v391
  %v629 = vpop.f32.mrf.mxu0
  %v630 = vadd.f32 0.0, %v629
  %v631 = vpop.f32.mrf.mxu0
  %632 = vmatprep.mubr.f32.mxu0 0.0
  %633 = vmatmul.mubr.f32.gmra.mxu0 %v392
  %v634 = vpop.f32.mrf.mxu0
  %v635 = vadd.f32 0.0, %v634
  %v636 = vpop.f32.mrf.mxu0
  %637 = vdwg.mxu0
  %v638 = vsub.f32 %v537, %v610
  %v639 = vsub.f32 %v538, %v615
  %v640 = vsub.f32 %v539, %v620
  %v641 = vsub.f32 %v540, %v625
  %v642 = vsub.f32 %v541, %v630
  %v643 = vsub.f32 %v542, %v635
  %644 = vmax.xlane.f32.xlu0 %v638
  %v645 = vpop.xlane.xlu0 %644
  %646 = vmax.xlane.f32.xlu0 %v639
  %v647 = vpop.xlane.xlu0 %646
  %648 = vmax.xlane.f32.xlu0 %v640
  %v649 = vpop.xlane.xlu0 %648
  %650 = vmax.xlane.f32.xlu0 %v641
  %v651 = vpop.xlane.xlu0 %650
  %652 = vmax.xlane.f32.xlu0 %v642
  %v653 = vpop.xlane.xlu0 %652
  %654 = vmax.xlane.f32.xlu0 %v643
  %v655 = vpop.xlane.xlu0 %654
  %v656 = vsub.f32 %v638, %v645
  %v657 = vsub.f32 %v639, %v647
  %v658 = vsub.f32 %v640, %v649
  %v659 = vsub.f32 %v641, %v651
  %v660 = vsub.f32 %v642, %v653
  %v661 = vsub.f32 %v643, %v655
  %v662 = vmul.f32 %v656, 1.442695
  %v663 = vpow.pop %v662
  %v664 = vmul.f32 %v657, 1.442695
  %v665 = vpow.pop %v664
  %v666 = vmul.f32 %v658, 1.442695
  %v667 = vpow.pop %v666
  %v668 = vmul.f32 %v659, 1.442695
  %v669 = vpow.pop %v668
  %v670 = vmul.f32 %v660, 1.442695
  %v671 = vpow.pop %v670
  %v672 = vmul.f32 %v661, 1.442695
  %v673 = vpow.pop %v672
  %v674 = vpack.c.bf16 %v665, %v663
  %v675 = vpack.c.bf16 %v669, %v667
  %v676 = vpack.c.bf16 %v673, %v671
  %v693 = vunpack.c.l.b16 %v22
  %v694 = vunpack.c.l.b16 %v23
  %v695 = vunpack.c.l.b16 %v24
  %v696 = vunpack.c.l.b16 %v25
  %v697 = vunpack.c.l.b16 %v26
  %v698 = vunpack.c.l.b16 %v27
  %v699 = vunpack.c.l.b16 %v28
  %v700 = vunpack.c.l.b16 %v29
  %v701 = vunpack.c.l.b16 %v30
  %v702 = vunpack.c.l.b16 %v31
  %v703 = vunpack.c.l.b16 %v32
  %v704 = vunpack.c.l.b16 %v33
  %v705 = vunpack.c.l.b16 %v34
  %v706 = vunpack.c.l.b16 %v35
  %v707 = vunpack.c.l.b16 %v36
  %v708 = vunpack.c.l.b16 %v37
  %v709 = vpack.c.b16 %v694, %v693
  %v710 = vpack.c.b16 %v696, %v695
  %v711 = vpack.c.b16 %v698, %v697
  %v712 = vpack.c.b16 %v700, %v699
  %v713 = vpack.c.b16 %v702, %v701
  %v714 = vpack.c.b16 %v704, %v703
  %v715 = vpack.c.b16 %v706, %v705
  %v716 = vpack.c.b16 %v708, %v707
  %725 = vmatprep.subr.bf16.mxu0 0
  %726 = vmatpush1.bf16.msra.mxu0 %v716
  %727 = vmatprep.subr.bf16.mxu0 0
  %728 = vmatpush1.bf16.msra.mxu0 %v715
  %729 = vmatprep.subr.bf16.mxu0 0
  %730 = vmatpush1.bf16.msra.mxu0 %v714
  %731 = vmatprep.subr.bf16.mxu0 0
  %732 = vmatpush1.bf16.msra.mxu0 %v713
  %733 = vmatprep.subr.bf16.mxu0 0
  %734 = vmatpush1.bf16.msra.mxu0 %v712
  %735 = vmatprep.subr.bf16.mxu0 0
  %736 = vmatpush1.bf16.msra.mxu0 %v711
  %737 = vmatprep.subr.bf16.mxu0 0
  %738 = vmatpush1.bf16.msra.mxu0 %v710
  %739 = vmatprep.subr.bf16.mxu0 0
  %740 = vmatpush1.bf16.msra.mxu0 %v709
  %741 = vmatprep.subr.bf16.mxu0 0
  %742 = vmatpush2.bf16.msra.mxu0 0
  %743 = vmatprep.subr.bf16.mxu0 0
  %744 = vmatpush2.bf16.msra.mxu0 0
  %745 = vmatprep.subr.bf16.mxu0 0
  %746 = vmatpush2.bf16.msra.mxu0 0
  %747 = vmatprep.subr.bf16.mxu0 0
  %748 = vmatpush2.bf16.msra.mxu0 0
  %749 = vmatprep.subr.bf16.mxu0 0
  %750 = vmatpush2.bf16.msra.mxu0 0
  %751 = vmatprep.subr.bf16.mxu0 0
  %752 = vmatpush2.bf16.msra.mxu0 0
  %753 = vmatprep.subr.bf16.mxu0 0
  %754 = vmatpush2.bf16.msra.mxu0 0
  %755 = vmatprep.subr.bf16.mxu0 0
  %756 = vmatpush2.bf16.msra.mxu0 0
  %757 = vmatprep.mubr.bf16.mxu0 0
  %758 = vmatmul.mubr.bf16.gmra.mxu0 %v674
  %v759 = vpop.f32.mrf.mxu0
  %v760 = vadd.f32 0.0, %v759
  %v761 = vpop.f32.mrf.mxu0
  %v762 = vpop.f32.mrf.mxu0
  %v763 = vadd.f32 0.0, %v762
  %v764 = vpop.f32.mrf.mxu0
  %765 = vmatprep.mubr.bf16.mxu0 0
  %766 = vmatmul.mubr.bf16.gmra.mxu0 %v675
  %v767 = vpop.f32.mrf.mxu0
  %v768 = vadd.f32 0.0, %v767
  %v769 = vpop.f32.mrf.mxu0
  %v770 = vpop.f32.mrf.mxu0
  %v771 = vadd.f32 0.0, %v770
  %v772 = vpop.f32.mrf.mxu0
  %773 = vmatprep.mubr.bf16.mxu0 0
  %774 = vmatmul.mubr.bf16.gmra.mxu0 %v676
  %v775 = vpop.f32.mrf.mxu0
  %v776 = vadd.f32 0.0, %v775
  %v777 = vpop.f32.mrf.mxu0
  %v778 = vpop.f32.mrf.mxu0
  %v779 = vadd.f32 0.0, %v778
  %v780 = vpop.f32.mrf.mxu0
  %781 = vdwg.mxu0
  %v782 = vadd.f32 %v610, %v645
  %v783 = vadd.f32 %v615, %v647
  %v784 = vadd.f32 %v620, %v649
  %v785 = vadd.f32 %v625, %v651
  %v786 = vadd.f32 %v630, %v653
  %v787 = vadd.f32 %v635, %v655
  %v788 = vlog2.pop %v760
  %v789 = vmul.f32 %v788, 0.6931472
  %v790 = vlog2.pop %v763
  %v791 = vmul.f32 %v790, 0.6931472
  %v792 = vlog2.pop %v768
  %v793 = vmul.f32 %v792, 0.6931472
  %v794 = vlog2.pop %v771
  %v795 = vmul.f32 %v794, 0.6931472
  %v796 = vlog2.pop %v776
  %v797 = vmul.f32 %v796, 0.6931472
  %v798 = vlog2.pop %v779
  %v799 = vmul.f32 %v798, 0.6931472
  %v800 = vadd.f32 %v782, %v789
  %v801 = vadd.f32 %v783, %v791
  %v802 = vadd.f32 %v784, %v793
  %v803 = vadd.f32 %v785, %v795
  %v804 = vadd.f32 %v786, %v797
  %v805 = vadd.f32 %v787, %v799
  %v806 = vmul.f32 %v800, 1.442695
  %v807 = vpow.pop %v806
  %v808 = vmul.f32 %v801, 1.442695
  %v809 = vpow.pop %v808
  %v810 = vmul.f32 %v802, 1.442695
  %v811 = vpow.pop %v810
  %v812 = vmul.f32 %v803, 1.442695
  %v813 = vpow.pop %v812
  %v814 = vmul.f32 %v804, 1.442695
  %v815 = vpow.pop %v814
  %v816 = vmul.f32 %v805, 1.442695
  %v817 = vpow.pop %v816
  %v818 = vld [vmem:[%s4] sm:$0x1]
  %vm819 = vcmask 392192
  %v821 = vsel %vm819, %v818, 0
  %823 = vmatprep.subr.mxu0 0.0
  %824 = vmatpush1.msra.mxu0 0.0
  %825 = vmatprep.subr.mxu0 0.0
  %826 = vmatpush1.msra.mxu0 0.0
  %827 = vmatprep.subr.mxu0 0.0
  %828 = vmatpush1.msra.mxu0 0.0
  %829 = vmatprep.subr.mxu0 0.0
  %830 = vmatpush1.msra.mxu0 0.0
  %831 = vmatprep.subr.mxu0 0.0
  %832 = vmatpush1.msra.mxu0 0.0
  %833 = vmatprep.subr.mxu0 0.0
  %834 = vmatpush1.msra.mxu0 0.0
  %835 = vmatprep.subr.mxu0 0.0
  %836 = vmatpush1.msra.mxu0 0.0
  %837 = vmatprep.subr.mxu0 0.0
  %838 = vmatpush1.msra.mxu0 0.0
  %839 = vmatprep.subr.mxu0 0.0
  %840 = vmatpush1.msra.mxu0 0.0
  %841 = vmatprep.subr.mxu0 0.0
  %842 = vmatpush1.msra.mxu0 0.0
  %843 = vmatprep.subr.mxu0 0.0
  %844 = vmatpush1.msra.mxu0 %v817
  %845 = vmatprep.subr.mxu0 0.0
  %846 = vmatpush1.msra.mxu0 %v815
  %847 = vmatprep.subr.mxu0 0.0
  %848 = vmatpush1.msra.mxu0 %v813
  %849 = vmatprep.subr.mxu0 0.0
  %850 = vmatpush1.msra.mxu0 %v811
  %851 = vmatprep.subr.mxu0 0.0
  %852 = vmatpush1.msra.mxu0 %v809
  %853 = vmatprep.subr.mxu0 0.0
  %854 = vmatpush1.msra.mxu0 %v807
  %855 = vmatprep.subr.mxu0 0.0
  %856 = vmatpush2.msra.mxu0 0.0
  %857 = vmatprep.subr.mxu0 0.0
  %858 = vmatpush2.msra.mxu0 0.0
  %859 = vmatprep.subr.mxu0 0.0
  %860 = vmatpush2.msra.mxu0 0.0
  %861 = vmatprep.subr.mxu0 0.0
  %862 = vmatpush2.msra.mxu0 0.0
  %863 = vmatprep.subr.mxu0 0.0
  %864 = vmatpush2.msra.mxu0 0.0
  %865 = vmatprep.subr.mxu0 0.0
  %866 = vmatpush2.msra.mxu0 0.0
  %867 = vmatprep.subr.mxu0 0.0
  %868 = vmatpush2.msra.mxu0 0.0
  %869 = vmatprep.subr.mxu0 0.0
  %870 = vmatpush2.msra.mxu0 0.0
  %871 = vmatprep.subr.mxu0 0.0
  %872 = vmatpush2.msra.mxu0 0.0
  %873 = vmatprep.subr.mxu0 0.0
  %874 = vmatpush2.msra.mxu0 0.0
  %875 = vmatprep.subr.mxu0 0.0
  %876 = vmatpush2.msra.mxu0 0.0
  %877 = vmatprep.subr.mxu0 0.0
  %878 = vmatpush2.msra.mxu0 0.0
  %879 = vmatprep.subr.mxu0 0.0
  %880 = vmatpush2.msra.mxu0 0.0
  %881 = vmatprep.subr.mxu0 0.0
  %882 = vmatpush2.msra.mxu0 0.0
  %883 = vmatprep.subr.mxu0 0.0
  %884 = vmatpush2.msra.mxu0 0.0
  %885 = vmatprep.subr.mxu0 0.0
  %886 = vmatpush2.msra.mxu0 0.0
  %887 = vmatprep.mubr.f32.mxu0 0.0
  %888 = vmatmul.mubr.f32.gmra.mxu0 %v821
  %v889 = vpop.f32.mrf.mxu0
  %v890 = vadd.f32 0.0, %v889
  %v891 = vpop.f32.mrf.mxu0
  %892 = vdwg.mxu0
  %893 = vst [vmem:[%s5] sm:$0x1] %v890
  // Predicated region
  $region22: #{stock_predictor_gru.1} parent=0 // pred_check
    _
  $region23: #{stock_predictor_gru.1} parent=0 // pred_check_branch
    %895 = sbr.rel (0) target = $region25
  $region24: #{stock_predictor_gru.1} parent=0 // pred_region
    _
  $region25: #{stock_predictor_gru.1} parent=0 // pred_fallthru
    _
  // Predicated region
  $region26: #{stock_predictor_gru.1} parent=0 // pred_check
    _
  $region27: #{stock_predictor_gru.1} parent=0 // pred_check_branch
    %897 = sbr.rel (0) target = $region29
  $region28: #{stock_predictor_gru.1} parent=0 // pred_region
    _
  $region29: #{stock_predictor_gru.1} parent=0 // pred_fallthru
    _

</llo_original>
